<compile_context>
chip_gen: v7x
topology: tpu7x:2x2x1
jax: 0.10.0
libtpu: 0.0.40
codegen_flags: <defaults>
</compile_context>

<pallas_src>
import functools

import jax
import jax.numpy as jnp
from jax.experimental import pallas as pl
from jax.experimental.pallas import tpu as pltpu


def _round_up(x, m):
    return ((x + m - 1) // m) * m


def _ode_rk4_kernel(x_ref, w1x_ref, w1t_ref, b1_ref, w2_ref, b2_ref, o_ref,
                    *, t0, dt, n_steps):
    """Fixed-step RK4 integration of f(t, y) = W2 @ tanh(y@W1x + t*W1t + b1) + b2.

    Everything (weights + state) stays in VMEM/vregs for the whole solve; the only
    HBM traffic is one x tile in and one y(T) tile out.
    """
    w1x = w1x_ref[...]
    w1t = w1t_ref[...]
    b1 = b1_ref[...]
    w2 = w2_ref[...]
    b2 = b2_ref[...]

    def f(t, y):
        # time channel folded as a rank-1 add instead of a host-side concat
        pre = jnp.dot(y, w1x, preferred_element_type=jnp.float32) + t * w1t + b1
        h = jnp.tanh(pre)                      # EUP
        return jnp.dot(h, w2, preferred_element_type=jnp.float32) + b2

    y0 = x_ref[...].astype(jnp.float32)

    def rk4_step(i, y):
        t = t0 + dt * i.astype(jnp.float32)
        k1 = f(t, y)
        k2 = f(t + 0.5 * dt, y + (0.5 * dt) * k1)
        k3 = f(t + 0.5 * dt, y + (0.5 * dt) * k2)
        k4 = f(t + dt, y + dt * k3)
        return y + (dt / 6.0) * (k1 + 2.0 * k2 + 2.0 * k3 + k4)

    yT = jax.lax.fori_loop(0, n_steps, rk4_step, y0)
    o_ref[...] = yT.astype(o_ref.dtype)


@functools.partial(jax.jit,
                   static_argnames=("autonomous", "t0", "t1", "n_steps", "batch_tile"))
def ode_block_forward(x, params, *, autonomous=True, t0=0.0, t1=1.0,
                      n_steps=8, batch_tile=None):
    """Pallas implementation of ODEBlock.forward(x) with integration_time=[t0, t1].

    Returns the torchdiffeq-style stack of shape (2, B, D): [x(t0), x(t1)].
    params: w1 (d_in, H), b1 (1, H), w2 (H, D), b2 (1, D);
            d_in = D if autonomous else D + 1 (row 0 of w1 is the time row).
    """
    w1, b1, w2, b2 = params["w1"], params["b1"], params["w2"], params["b2"]
    b1 = b1.reshape(1, -1)
    b2 = b2.reshape(1, -1)

    B, D = x.shape
    d_in, H = w1.shape
    d_out = w2.shape[1]
    assert d_out == D, "ODE dynamics must map state dim to state dim"

    if autonomous:
        assert d_in == D, "autonomous=True expects w1 of shape (D, H)"
        w1x = w1
        w1t = jnp.zeros((1, H), w1.dtype)
    else:
        assert d_in == D + 1, "autonomous=False expects w1 of shape (D+1, H)"
        w1t = w1[0:1, :]      # time row (torch.cat puts the t column first)
        w1x = w1[1:, :]

    # Lane-dense padding: state & hidden dims padded to multiples of 128; padded
    # columns/rows are zero so they contribute nothing and stay zero through RK4.
    D_pad = _round_up(D, 128)
    H_pad = _round_up(H, 128)

    if batch_tile is None:
        batch_tile = min(_round_up(B, 8), 1024)
    B_pad = _round_up(B, batch_tile)

    dtype = x.dtype
    x_p = jnp.zeros((B_pad, D_pad), dtype).at[:B, :D].set(x)
    w1x_p = jnp.zeros((D_pad, H_pad), w1.dtype).at[:D, :H].set(w1x)
    w1t_p = jnp.zeros((1, H_pad), w1.dtype).at[:, :H].set(w1t)
    b1_p = jnp.zeros((1, H_pad), b1.dtype).at[:, :H].set(b1)
    w2_p = jnp.zeros((H_pad, D_pad), w2.dtype).at[:H, :D].set(w2)
    b2_p = jnp.zeros((1, D_pad), b2.dtype).at[:, :D].set(b2)

    dt = (float(t1) - float(t0)) / int(n_steps)
    kernel = functools.partial(_ode_rk4_kernel, t0=float(t0), dt=dt,
                               n_steps=int(n_steps))

    grid = (B_pad // batch_tile,)
    yT_pad = pl.pallas_call(
        kernel,
        out_shape=jax.ShapeDtypeStruct((B_pad, D_pad), dtype),
        grid_spec=pltpu.PrefetchScalarGridSpec(
            num_scalar_prefetch=0,
            grid=grid,
            in_specs=[
                pl.BlockSpec((batch_tile, D_pad), lambda i: (i, 0)),  # x tile
                pl.BlockSpec((D_pad, H_pad), lambda i: (0, 0)),       # w1 (state rows)
                pl.BlockSpec((1, H_pad), lambda i: (0, 0)),           # w1 time row
                pl.BlockSpec((1, H_pad), lambda i: (0, 0)),           # b1
                pl.BlockSpec((H_pad, D_pad), lambda i: (0, 0)),       # w2
                pl.BlockSpec((1, D_pad), lambda i: (0, 0)),           # b2
            ],
            out_specs=pl.BlockSpec((batch_tile, D_pad), lambda i: (i, 0)),
        ),
        compiler_params=pltpu.CompilerParams(
            dimension_semantics=("parallel",),
        ),
    )(x_p, w1x_p, w1t_p, b1_p, w2_p, b2_p)

    yT = yT_pad[:B, :D]
    # torchdiffeq returns the solution at every requested time point: [y(t0), y(t1)]
    return jnp.stack([x, yT], axis=0)


def _make_params(key, d_in, hidden, d_out, dtype=jnp.float32):
    k1, k2, k3, k4 = jax.random.split(key, 4)
    s1 = 1.0 / jnp.sqrt(jnp.asarray(d_in, dtype))
    s2 = 1.0 / jnp.sqrt(jnp.asarray(hidden, dtype))
    return {
        "w1": jax.random.uniform(k1, (d_in, hidden), dtype, -s1, s1),
        "b1": jax.random.uniform(k2, (1, hidden), dtype, -s1, s1),
        "w2": jax.random.uniform(k3, (hidden, d_out), dtype, -s2, s2),
        "b2": jax.random.uniform(k4, (1, d_out), dtype, -s2, s2),
    }


def _reference_ode_block(x, params, *, autonomous, t0=0.0, t1=1.0, n_steps=8):
    """Pure-JAX reference: same dynamics net, same fixed-step RK4."""
    w1, b1, w2, b2 = params["w1"], params["b1"], params["w2"], params["b2"]

    def f(t, y):
        inp = y
        if not autonomous:
            t_col = jnp.ones_like(y[:, :1]) * t
            inp = jnp.concatenate([t_col, y], axis=1)
        h = jnp.tanh(inp @ w1 + b1)
        return h @ w2 + b2

    dt = (t1 - t0) / n_steps
    y = x.astype(jnp.float32)
    for i in range(n_steps):
        t = t0 + dt * i
        k1 = f(t, y)
        k2 = f(t + 0.5 * dt, y + 0.5 * dt * k1)
        k3 = f(t + 0.5 * dt, y + 0.5 * dt * k2)
        k4 = f(t + dt, y + dt * k3)
        y = y + (dt / 6.0) * (k1 + 2.0 * k2 + 2.0 * k3 + k4)
    return jnp.stack([x, y.astype(x.dtype)], axis=0)


if __name__ == "__main__":
    key = jax.random.PRNGKey(0)
    kx, kp_auto, kp_na = jax.random.split(key, 3)

    B, D, H = 16, 32, 32           # batch, state dim, hidden dim
    N_STEPS = 8
    x = jax.random.normal(kx, (B, D), jnp.float32)

    # autonomous=True: dynamics net sees d_in = D
    params_auto = _make_params(kp_auto, D, H, D)
    out_auto = ode_block_forward(x, params_auto, autonomous=True, n_steps=N_STEPS)
    out_auto = jax.block_until_ready(out_auto)
    ref_auto = _reference_ode_block(x, params_auto, autonomous=True, n_steps=N_STEPS)

    # autonomous=False: dynamics net sees d_in = D + 1 (time channel), folded in-kernel
    params_na = _make_params(kp_na, D + 1, H, D)
    out_na = ode_block_forward(x, params_na, autonomous=False, n_steps=N_STEPS)
    out_na = jax.block_until_ready(out_na)
    ref_na = _reference_ode_block(x, params_na, autonomous=False, n_steps=N_STEPS)

    assert out_auto.shape == (2, B, D) and out_na.shape == (2, B, D)
    assert jnp.allclose(out_auto, ref_auto, atol=1e-4, rtol=1e-4)
    assert jnp.allclose(out_na, ref_na, atol=1e-4, rtol=1e-4)

    print("KERNEL_OK")
</pallas_src>

<mosaic_0001>
module attributes {stable_mosaic.version = 11 : i64} {
  func.func @_ode_rk4_kernel(%arg0: i32, %arg1: memref<16x128xf32, #tpu.memory_space<vmem>>, %arg2: memref<128x128xf32, #tpu.memory_space<vmem>>, %arg3: memref<1x128xf32, #tpu.memory_space<vmem>>, %arg4: memref<1x128xf32, #tpu.memory_space<vmem>>, %arg5: memref<128x128xf32, #tpu.memory_space<vmem>>, %arg6: memref<1x128xf32, #tpu.memory_space<vmem>>, %arg7: memref<16x128xf32, #tpu.memory_space<vmem>>) attributes {dimension_semantics = [#tpu.dimension_semantics<parallel>], iteration_bounds = array<i64: 1>, scalar_prefetch = 0 : i64, scratch_operands = 0 : i64, tpu.core_type = #tpu.core_type<tc>, window_params = [{transform_indices = @transform_0, window_bounds = array<i64: 16, 128>}, {pipeline_mode = #tpu.pipeline_mode<synchronous>, transform_indices = @transform_1, window_bounds = array<i64: 128, 128>}, {pipeline_mode = #tpu.pipeline_mode<synchronous>, transform_indices = @transform_2, window_bounds = array<i64: 1, 128>}, {pipeline_mode = #tpu.pipeline_mode<synchronous>, transform_indices = @transform_3, window_bounds = array<i64: 1, 128>}, {pipeline_mode = #tpu.pipeline_mode<synchronous>, transform_indices = @transform_4, window_bounds = array<i64: 128, 128>}, {pipeline_mode = #tpu.pipeline_mode<synchronous>, transform_indices = @transform_5, window_bounds = array<i64: 1, 128>}, {transform_indices = @transform_6, window_bounds = array<i64: 16, 128>}]} {
    %c0 = arith.constant 0 : index
    %c0_0 = arith.constant 0 : index
    %0 = vector.load %arg2[%c0, %c0_0] : memref<128x128xf32, #tpu.memory_space<vmem>>, vector<128x128xf32>
    %c0_1 = arith.constant 0 : index
    %c0_2 = arith.constant 0 : index
    %1 = vector.load %arg3[%c0_1, %c0_2] : memref<1x128xf32, #tpu.memory_space<vmem>>, vector<1x128xf32>
    %c0_3 = arith.constant 0 : index
    %c0_4 = arith.constant 0 : index
    %2 = vector.load %arg4[%c0_3, %c0_4] : memref<1x128xf32, #tpu.memory_space<vmem>>, vector<1x128xf32>
    %c0_5 = arith.constant 0 : index
    %c0_6 = arith.constant 0 : index
    %3 = vector.load %arg5[%c0_5, %c0_6] : memref<128x128xf32, #tpu.memory_space<vmem>>, vector<128x128xf32>
    %c0_7 = arith.constant 0 : index
    %c0_8 = arith.constant 0 : index
    %4 = vector.load %arg6[%c0_7, %c0_8] : memref<1x128xf32, #tpu.memory_space<vmem>>, vector<1x128xf32>
    %c0_9 = arith.constant 0 : index
    %c0_10 = arith.constant 0 : index
    %5 = vector.load %arg1[%c0_9, %c0_10] : memref<16x128xf32, #tpu.memory_space<vmem>>, vector<16x128xf32>
    %c0_i32 = arith.constant 0 : i32
    %c8_i32 = arith.constant 8 : i32
    %6 = arith.addi %c0_i32, %c8_i32 : i32
    %c1_i32 = arith.constant 1 : i32
    %7 = scf.for %arg8 = %c0_i32 to %6 step %c1_i32 iter_args(%arg9 = %5) -> (vector<16x128xf32>)  : i32 {
      %9 = arith.sitofp %arg8 : i32 to f32
      %cst = arith.constant 1.250000e-01 : f32
      %10 = arith.mulf %cst, %9 : f32
      %cst_14 = arith.constant 0.000000e+00 : f32
      %11 = arith.addf %cst_14, %10 : f32
      %cst_15 = arith.constant dense<0.000000e+00> : vector<16x128xf32>
      %12 = tpu.matmul %arg9, %0, %cst_15 {dimension_numbers = #tpu.dot_dimension_numbers<[1], [0], [0], [1], [0, 0, 1, 1], [], []>} : vector<16x128xf32>, vector<128x128xf32>, vector<16x128xf32> -> vector<16x128xf32>
      %13 = vector.broadcast %11 : f32 to vector<1x128xf32>
      %14 = arith.mulf %13, %1 : vector<1x128xf32>
      %15 = vector.broadcast %14 : vector<1x128xf32> to vector<16x128xf32>
      %16 = arith.addf %12, %15 : vector<16x128xf32>
      %17 = vector.broadcast %2 : vector<1x128xf32> to vector<16x128xf32>
      %18 = arith.addf %16, %17 : vector<16x128xf32>
      %19 = math.tanh %18 : vector<16x128xf32>
      %cst_16 = arith.constant dense<0.000000e+00> : vector<16x128xf32>
      %20 = tpu.matmul %19, %3, %cst_16 {dimension_numbers = #tpu.dot_dimension_numbers<[1], [0], [0], [1], [0, 0, 1, 1], [], []>} : vector<16x128xf32>, vector<128x128xf32>, vector<16x128xf32> -> vector<16x128xf32>
      %21 = vector.broadcast %4 : vector<1x128xf32> to vector<16x128xf32>
      %22 = arith.addf %20, %21 : vector<16x128xf32>
      %cst_17 = arith.constant 6.250000e-02 : f32
      %23 = arith.addf %11, %cst_17 : f32
      %cst_18 = arith.constant 6.250000e-02 : f32
      %24 = vector.broadcast %cst_18 : f32 to vector<16x128xf32>
      %25 = arith.mulf %24, %22 : vector<16x128xf32>
      %26 = arith.addf %arg9, %25 : vector<16x128xf32>
      %cst_19 = arith.constant dense<0.000000e+00> : vector<16x128xf32>
      %27 = tpu.matmul %26, %0, %cst_19 {dimension_numbers = #tpu.dot_dimension_numbers<[1], [0], [0], [1], [0, 0, 1, 1], [], []>} : vector<16x128xf32>, vector<128x128xf32>, vector<16x128xf32> -> vector<16x128xf32>
      %28 = vector.broadcast %23 : f32 to vector<1x128xf32>
      %29 = arith.mulf %28, %1 : vector<1x128xf32>
      %30 = vector.broadcast %29 : vector<1x128xf32> to vector<16x128xf32>
      %31 = arith.addf %27, %30 : vector<16x128xf32>
      %32 = vector.broadcast %2 : vector<1x128xf32> to vector<16x128xf32>
      %33 = arith.addf %31, %32 : vector<16x128xf32>
      %34 = math.tanh %33 : vector<16x128xf32>
      %cst_20 = arith.constant dense<0.000000e+00> : vector<16x128xf32>
      %35 = tpu.matmul %34, %3, %cst_20 {dimension_numbers = #tpu.dot_dimension_numbers<[1], [0], [0], [1], [0, 0, 1, 1], [], []>} : vector<16x128xf32>, vector<128x128xf32>, vector<16x128xf32> -> vector<16x128xf32>
      %36 = vector.broadcast %4 : vector<1x128xf32> to vector<16x128xf32>
      %37 = arith.addf %35, %36 : vector<16x128xf32>
      %cst_21 = arith.constant 6.250000e-02 : f32
      %38 = arith.addf %11, %cst_21 : f32
      %cst_22 = arith.constant 6.250000e-02 : f32
      %39 = vector.broadcast %cst_22 : f32 to vector<16x128xf32>
      %40 = arith.mulf %39, %37 : vector<16x128xf32>
      %41 = arith.addf %arg9, %40 : vector<16x128xf32>
      %cst_23 = arith.constant dense<0.000000e+00> : vector<16x128xf32>
      %42 = tpu.matmul %41, %0, %cst_23 {dimension_numbers = #tpu.dot_dimension_numbers<[1], [0], [0], [1], [0, 0, 1, 1], [], []>} : vector<16x128xf32>, vector<128x128xf32>, vector<16x128xf32> -> vector<16x128xf32>
      %43 = vector.broadcast %38 : f32 to vector<1x128xf32>
      %44 = arith.mulf %43, %1 : vector<1x128xf32>
      %45 = vector.broadcast %44 : vector<1x128xf32> to vector<16x128xf32>
      %46 = arith.addf %42, %45 : vector<16x128xf32>
      %47 = vector.broadcast %2 : vector<1x128xf32> to vector<16x128xf32>
      %48 = arith.addf %46, %47 : vector<16x128xf32>
      %49 = math.tanh %48 : vector<16x128xf32>
      %cst_24 = arith.constant dense<0.000000e+00> : vector<16x128xf32>
      %50 = tpu.matmul %49, %3, %cst_24 {dimension_numbers = #tpu.dot_dimension_numbers<[1], [0], [0], [1], [0, 0, 1, 1], [], []>} : vector<16x128xf32>, vector<128x128xf32>, vector<16x128xf32> -> vector<16x128xf32>
      %51 = vector.broadcast %4 : vector<1x128xf32> to vector<16x128xf32>
      %52 = arith.addf %50, %51 : vector<16x128xf32>
      %cst_25 = arith.constant 1.250000e-01 : f32
      %53 = arith.addf %11, %cst_25 : f32
      %cst_26 = arith.constant 1.250000e-01 : f32
      %54 = vector.broadcast %cst_26 : f32 to vector<16x128xf32>
      %55 = arith.mulf %54, %52 : vector<16x128xf32>
      %56 = arith.addf %arg9, %55 : vector<16x128xf32>
      %cst_27 = arith.constant dense<0.000000e+00> : vector<16x128xf32>
      %57 = tpu.matmul %56, %0, %cst_27 {dimension_numbers = #tpu.dot_dimension_numbers<[1], [0], [0], [1], [0, 0, 1, 1], [], []>} : vector<16x128xf32>, vector<128x128xf32>, vector<16x128xf32> -> vector<16x128xf32>
      %58 = vector.broadcast %53 : f32 to vector<1x128xf32>
      %59 = arith.mulf %58, %1 : vector<1x128xf32>
      %60 = vector.broadcast %59 : vector<1x128xf32> to vector<16x128xf32>
      %61 = arith.addf %57, %60 : vector<16x128xf32>
      %62 = vector.broadcast %2 : vector<1x128xf32> to vector<16x128xf32>
      %63 = arith.addf %61, %62 : vector<16x128xf32>
      %64 = math.tanh %63 : vector<16x128xf32>
      %cst_28 = arith.constant dense<0.000000e+00> : vector<16x128xf32>
      %65 = tpu.matmul %64, %3, %cst_28 {dimension_numbers = #tpu.dot_dimension_numbers<[1], [0], [0], [1], [0, 0, 1, 1], [], []>} : vector<16x128xf32>, vector<128x128xf32>, vector<16x128xf32> -> vector<16x128xf32>
      %66 = vector.broadcast %4 : vector<1x128xf32> to vector<16x128xf32>
      %67 = arith.addf %65, %66 : vector<16x128xf32>
      %cst_29 = arith.constant 2.000000e+00 : f32
      %68 = vector.broadcast %cst_29 : f32 to vector<16x128xf32>
      %69 = arith.mulf %68, %37 : vector<16x128xf32>
      %70 = arith.addf %22, %69 : vector<16x128xf32>
      %cst_30 = arith.constant 2.000000e+00 : f32
      %71 = vector.broadcast %cst_30 : f32 to vector<16x128xf32>
      %72 = arith.mulf %71, %52 : vector<16x128xf32>
      %73 = arith.addf %70, %72 : vector<16x128xf32>
      %74 = arith.addf %73, %67 : vector<16x128xf32>
      %cst_31 = arith.constant 0.020833334 : f32
      %75 = vector.broadcast %cst_31 : f32 to vector<16x128xf32>
      %76 = arith.mulf %75, %74 : vector<16x128xf32>
      %77 = arith.addf %arg9, %76 : vector<16x128xf32>
      scf.yield %77 : vector<16x128xf32>
    }
    %c8_i32_11 = arith.constant 8 : i32
    %c0_12 = arith.constant 0 : index
    %c0_13 = arith.constant 0 : index
    %8 = vector.load %arg7[%c0_12, %c0_13] : memref<16x128xf32, #tpu.memory_space<vmem>>, vector<16x128xf32>
    tpu.vector_store %arg7[%c0_12, %c0_13], %7 {strides = array<i32>} : memref<16x128xf32, #tpu.memory_space<vmem>>, vector<16x128xf32>,
    return
  }
  func.func @transform_0(%arg0: i32) -> (i32, i32) {
    %c0_i32 = arith.constant 0 : i32
    %c0_i32_0 = arith.constant 0 : i32
    return %arg0, %c0_i32 : i32, i32
  }
  func.func @transform_1(%arg0: i32) -> (i32, i32) {
    %c0_i32 = arith.constant 0 : i32
    %c0_i32_0 = arith.constant 0 : i32
    %c0_i32_1 = arith.constant 0 : i32
    return %c0_i32, %c0_i32_0 : i32, i32
  }
  func.func @transform_2(%arg0: i32) -> (i32, i32) {
    %c0_i32 = arith.constant 0 : i32
    %c0_i32_0 = arith.constant 0 : i32
    %c0_i32_1 = arith.constant 0 : i32
    return %c0_i32, %c0_i32_0 : i32, i32
  }
  func.func @transform_3(%arg0: i32) -> (i32, i32) {
    %c0_i32 = arith.constant 0 : i32
    %c0_i32_0 = arith.constant 0 : i32
    %c0_i32_1 = arith.constant 0 : i32
    return %c0_i32, %c0_i32_0 : i32, i32
  }
  func.func @transform_4(%arg0: i32) -> (i32, i32) {
    %c0_i32 = arith.constant 0 : i32
    %c0_i32_0 = arith.constant 0 : i32
    %c0_i32_1 = arith.constant 0 : i32
    return %c0_i32, %c0_i32_0 : i32, i32
  }
  func.func @transform_5(%arg0: i32) -> (i32, i32) {
    %c0_i32 = arith.constant 0 : i32
    %c0_i32_0 = arith.constant 0 : i32
    %c0_i32_1 = arith.constant 0 : i32
    return %c0_i32, %c0_i32_0 : i32, i32
  }
  func.func @transform_6(%arg0: i32) -> (i32, i32) {
    %c0_i32 = arith.constant 0 : i32
    %c0_i32_0 = arith.constant 0 : i32
    return %arg0, %c0_i32 : i32, i32
  }
}

</mosaic_0001>

<llo_original>
// kernel: ode_block_forward.1
$region0: #{ode_block_forward.1}
  #allocation0 [shape = 'u32[]', space=smem, size = 0x4, offset = 0x4, fixed_abs, tag = 'smem constant byte address 0x4 - core index']
  #allocation1 [shape = 'u32[144,128]{1,0:T(1,128)}', space=vmem, size = 0x12000, scoped, tag = 'internal scratch']
  %s0 = inlined_call_operand.vmem [shape: f32[16,128], index: 0, kind: input, shape index: {}]
  %s1 = inlined_call_operand.vmem [shape: f32[128,128], index: 1, kind: input, shape index: {}]
  %s2 = inlined_call_operand.vmem [shape: f32[1,128], index: 2, kind: input, shape index: {}]
  %s3 = inlined_call_operand.vmem [shape: f32[1,128], index: 3, kind: input, shape index: {}]
  %s4 = inlined_call_operand.vmem [shape: f32[128,128], index: 4, kind: input, shape index: {}]
  %s5 = inlined_call_operand.vmem [shape: f32[1,128], index: 5, kind: input, shape index: {}]
  %s6 = inlined_call_operand.vmem [shape: f32[16,128], index: 6, kind: output, shape index: {}]
  %s7 = sld [smem:[#allocation0]]
  $region41: #{ode_block_forward.1} parent=0
    _
  %s9 = ssub.s32 1, %s7
  %s10 = scalar_select 0, %s9, %s7
  // Predicated region
  $region2: #{ode_block_forward.1} parent=0 // pred_check
    _
  $region3: #{ode_block_forward.1} parent=0 // pred_check_branch
    %12 = sbr.rel (0) target = $region5
  $region4: #{ode_block_forward.1} parent=0 // pred_region
    _
  $region5: #{ode_block_forward.1} parent=0 // pred_fallthru
    _
  // Predicated region
  $region6: #{ode_block_forward.1} parent=0 // pred_check
    _
  $region7: #{ode_block_forward.1} parent=0 // pred_check_branch
    %14 = sbr.rel (0) target = $region9
  $region8: #{ode_block_forward.1} parent=0 // pred_region
    _
  $region9: #{ode_block_forward.1} parent=0 // pred_fallthru
    _
  // Predicated region
  $region10: #{ode_block_forward.1} parent=0 // pred_check
    _
  $region11: #{ode_block_forward.1} parent=0 // pred_check_branch
    %16 = sbr.rel (0) target = $region13
  $region12: #{ode_block_forward.1} parent=0 // pred_region
    _
  $region13: #{ode_block_forward.1} parent=0 // pred_fallthru
    _
  // Predicated region
  $region14: #{ode_block_forward.1} parent=0 // pred_check
    _
  $region15: #{ode_block_forward.1} parent=0 // pred_check_branch
    %18 = sbr.rel (0) target = $region17
  $region16: #{ode_block_forward.1} parent=0 // pred_region
    _
  $region17: #{ode_block_forward.1} parent=0 // pred_fallthru
    _
  // Predicated region
  $region18: #{ode_block_forward.1} parent=0 // pred_check
    _
  $region19: #{ode_block_forward.1} parent=0 // pred_check_branch
    %20 = sbr.rel (0) target = $region21
  $region20: #{ode_block_forward.1} parent=0 // pred_region
    _
  $region21: #{ode_block_forward.1} parent=0 // pred_fallthru
    _
  // Predicated region
  $region22: #{ode_block_forward.1} parent=0 // pred_check
    _
  $region23: #{ode_block_forward.1} parent=0 // pred_check_branch
    %22 = sbr.rel (0) target = $region25
  $region24: #{ode_block_forward.1} parent=0 // pred_region
    _
  $region25: #{ode_block_forward.1} parent=0 // pred_fallthru
    _
  %v23 = vld [vmem:[%s1] sm:$0xff]
  %v24 = vld [vmem:[%s1 + $0x8] sm:$0xff]
  %v25 = vld [vmem:[%s1 + $0x10] sm:$0xff]
  %v26 = vld [vmem:[%s1 + $0x18] sm:$0xff]
  %v27 = vld [vmem:[%s1 + $0x20] sm:$0xff]
  %v28 = vld [vmem:[%s1 + $0x28] sm:$0xff]
  %v29 = vld [vmem:[%s1 + $0x30] sm:$0xff]
  %v30 = vld [vmem:[%s1 + $0x38] sm:$0xff]
  %v31 = vld [vmem:[%s1 + $0x40] sm:$0xff]
  %v32 = vld [vmem:[%s1 + $0x48] sm:$0xff]
  %v33 = vld [vmem:[%s1 + $0x50] sm:$0xff]
  %v34 = vld [vmem:[%s1 + $0x58] sm:$0xff]
  %v35 = vld [vmem:[%s1 + $0x60] sm:$0xff]
  %v36 = vld [vmem:[%s1 + $0x68] sm:$0xff]
  %v37 = vld [vmem:[%s1 + $0x70] sm:$0xff]
  %v38 = vld [vmem:[%s1 + $0x78] sm:$0xff]
  %v39 = vld [vmem:[%s2] sm:$0x1]
  %v40 = vld [vmem:[%s3] sm:$0x1]
  %v41 = vld [vmem:[%s4] sm:$0xff]
  %v42 = vld [vmem:[%s4 + $0x8] sm:$0xff]
  %v43 = vld [vmem:[%s4 + $0x10] sm:$0xff]
  %v44 = vld [vmem:[%s4 + $0x18] sm:$0xff]
  %v45 = vld [vmem:[%s4 + $0x20] sm:$0xff]
  %v46 = vld [vmem:[%s4 + $0x28] sm:$0xff]
  %v47 = vld [vmem:[%s4 + $0x30] sm:$0xff]
  %v48 = vld [vmem:[%s4 + $0x38] sm:$0xff]
  %v49 = vld [vmem:[%s4 + $0x40] sm:$0xff]
  %v50 = vld [vmem:[%s4 + $0x48] sm:$0xff]
  %v51 = vld [vmem:[%s4 + $0x50] sm:$0xff]
  %v52 = vld [vmem:[%s4 + $0x58] sm:$0xff]
  %v53 = vld [vmem:[%s4 + $0x60] sm:$0xff]
  %v54 = vld [vmem:[%s4 + $0x68] sm:$0xff]
  %v55 = vld [vmem:[%s4 + $0x70] sm:$0xff]
  %v56 = vld [vmem:[%s4 + $0x78] sm:$0xff]
  %v57 = vld [vmem:[%s5] sm:$0x1]
  %v58 = vld [vmem:[%s0] sm:$0xff]
  %v59 = vld [vmem:[%s0 + $0x8] sm:$0xff]
  loop: start=0, step=1, limit=8
  $region26: #{ode_block_forward.1} parent=0 // loop_pre_header
    _
  $region27: #{ode_block_forward.1} parent=0 // loop_header
    %s61 = sphi 0, %s65
    %p62 = scmp.ge.s32.totalorder %s61, 8
    %v66 = vphi %v58, %v749
    %v67 = vphi %v59, %v750
  $region28: #{ode_block_forward.1} parent=0 // loop_header_branch
    %64 = sbr.rel (%p62) target = $region32
  $region29: #{ode_block_forward.1} parent=0 // loop_body
    %s68 = scvt.s32.f32 %s61
    %s69 = smul.f32 %s68, 0.125
    %s70 = sadd.f32 %s69, 0.0
    %v71 = vstv %s70
    %v72 = vmul.f32 %v71, %v39
    %v74 = vlaneseq
    %v75 = vshrl.u32 %v74, 7
    %v76 = vsub.s32 0, %v75
    %v77 = vrot.slane %v72, %v76
    %79 = vmatprep.subr.mxu0 0.0
    %80 = vmatpush1.msra.mxu0 %v23
    %81 = vmatprep.subr.mxu0 0.0
    %82 = vmatpush1.msra.mxu0 %v24
    %83 = vmatprep.subr.mxu0 0.0
    %84 = vmatpush1.msra.mxu0 %v25
    %85 = vmatprep.subr.mxu0 0.0
    %86 = vmatpush1.msra.mxu0 %v26
    %87 = vmatprep.subr.mxu0 0.0
    %88 = vmatpush1.msra.mxu0 %v27
    %89 = vmatprep.subr.mxu0 0.0
    %90 = vmatpush1.msra.mxu0 %v28
    %91 = vmatprep.subr.mxu0 0.0
    %92 = vmatpush1.msra.mxu0 %v29
    %93 = vmatprep.subr.mxu0 0.0
    %94 = vmatpush1.msra.mxu0 %v30
    %95 = vmatprep.subr.mxu0 0.0
    %96 = vmatpush1.msra.mxu0 %v31
    %97 = vmatprep.subr.mxu0 0.0
    %98 = vmatpush1.msra.mxu0 %v32
    %99 = vmatprep.subr.mxu0 0.0
    %100 = vmatpush1.msra.mxu0 %v33
    %101 = vmatprep.subr.mxu0 0.0
    %102 = vmatpush1.msra.mxu0 %v34
    %103 = vmatprep.subr.mxu0 0.0
    %104 = vmatpush1.msra.mxu0 %v35
    %105 = vmatprep.subr.mxu0 0.0
    %106 = vmatpush1.msra.mxu0 %v36
    %107 = vmatprep.subr.mxu0 0.0
    %108 = vmatpush1.msra.mxu0 %v37
    %109 = vmatprep.subr.mxu0 0.0
    %110 = vmatpush1.msra.mxu0 %v38
    %111 = vmatprep.subr.mxu0 0.0
    %112 = vmatpush1.msra.mxu0 0.0
    %113 = vmatprep.subr.mxu0 0.0
    %114 = vmatpush1.msra.mxu0 0.0
    %115 = vmatprep.subr.mxu0 0.0
    %116 = vmatpush1.msra.mxu0 0.0
    %117 = vmatprep.subr.mxu0 0.0
    %118 = vmatpush1.msra.mxu0 0.0
    %119 = vmatprep.subr.mxu0 0.0
    %120 = vmatpush1.msra.mxu0 0.0
    %121 = vmatprep.subr.mxu0 0.0
    %122 = vmatpush1.msra.mxu0 0.0
    %123 = vmatprep.subr.mxu0 0.0
    %124 = vmatpush1.msra.mxu0 0.0
    %125 = vmatprep.subr.mxu0 0.0
    %126 = vmatpush1.msra.mxu0 0.0
    %127 = vmatprep.subr.mxu0 0.0
    %128 = vmatpush1.msra.mxu0 0.0
    %129 = vmatprep.subr.mxu0 0.0
    %130 = vmatpush1.msra.mxu0 0.0
    %131 = vmatprep.subr.mxu0 0.0
    %132 = vmatpush1.msra.mxu0 0.0
    %133 = vmatprep.subr.mxu0 0.0
    %134 = vmatpush1.msra.mxu0 0.0
    %135 = vmatprep.subr.mxu0 0.0
    %136 = vmatpush1.msra.mxu0 0.0
    %137 = vmatprep.subr.mxu0 0.0
    %138 = vmatpush1.msra.mxu0 0.0
    %139 = vmatprep.subr.mxu0 0.0
    %140 = vmatpush1.msra.mxu0 0.0
    %141 = vmatprep.subr.mxu0 0.0
    %142 = vmatpush1.msra.mxu0 0.0
    %143 = vmatprep.mubr.f32.mxu0 0.0
    %144 = vmatmul.mubr.f32.gmra.mrb[0].mxu0 %v66
    %v145 = vpop.f32.mrb[0].mxu0
    %v146 = vadd.f32 %v77, %v145
    %v147 = vpop.f32.mrb[0].mxu0
    %148 = vmatprep.mubr.f32.mxu0 0.0
    %149 = vmatmul.mubr.f32.gmra.mrb[0].mxu0 %v67
    %v150 = vpop.f32.mrb[0].mxu0
    %v151 = vadd.f32 %v77, %v150
    %v152 = vpop.f32.mrb[0].mxu0
    %153 = vdwg.mxu0
    %v155 = vlaneseq
    %v156 = vshrl.u32 %v155, 7
    %v157 = vsub.s32 0, %v156
    %v158 = vrot.slane %v40, %v157
    %v160 = vadd.f32 %v146, %v158
    %v161 = vadd.f32 %v151, %v158
    %v162 = vtanh.pop %v160
    %v163 = vtanh.pop %v161
    %v165 = vlaneseq
    %v166 = vshrl.u32 %v165, 7
    %v167 = vsub.s32 0, %v166
    %v168 = vrot.slane %v57, %v167
    %170 = vmatprep.subr.mxu0 0.0
    %171 = vmatpush1.msra.mxu0 %v41
    %172 = vmatprep.subr.mxu0 0.0
    %173 = vmatpush1.msra.mxu0 %v42
    %174 = vmatprep.subr.mxu0 0.0
    %175 = vmatpush1.msra.mxu0 %v43
    %176 = vmatprep.subr.mxu0 0.0
    %177 = vmatpush1.msra.mxu0 %v44
    %178 = vmatprep.subr.mxu0 0.0
    %179 = vmatpush1.msra.mxu0 %v45
    %180 = vmatprep.subr.mxu0 0.0
    %181 = vmatpush1.msra.mxu0 %v46
    %182 = vmatprep.subr.mxu0 0.0
    %183 = vmatpush1.msra.mxu0 %v47
    %184 = vmatprep.subr.mxu0 0.0
    %185 = vmatpush1.msra.mxu0 %v48
    %186 = vmatprep.subr.mxu0 0.0
    %187 = vmatpush1.msra.mxu0 %v49
    %188 = vmatprep.subr.mxu0 0.0
    %189 = vmatpush1.msra.mxu0 %v50
    %190 = vmatprep.subr.mxu0 0.0
    %191 = vmatpush1.msra.mxu0 %v51
    %192 = vmatprep.subr.mxu0 0.0
    %193 = vmatpush1.msra.mxu0 %v52
    %194 = vmatprep.subr.mxu0 0.0
    %195 = vmatpush1.msra.mxu0 %v53
    %196 = vmatprep.subr.mxu0 0.0
    %197 = vmatpush1.msra.mxu0 %v54
    %198 = vmatprep.subr.mxu0 0.0
    %199 = vmatpush1.msra.mxu0 %v55
    %200 = vmatprep.subr.mxu0 0.0
    %201 = vmatpush1.msra.mxu0 %v56
    %202 = vmatprep.subr.mxu0 0.0
    %203 = vmatpush1.msra.mxu0 0.0
    %204 = vmatprep.subr.mxu0 0.0
    %205 = vmatpush1.msra.mxu0 0.0
    %206 = vmatprep.subr.mxu0 0.0
    %207 = vmatpush1.msra.mxu0 0.0
    %208 = vmatprep.subr.mxu0 0.0
    %209 = vmatpush1.msra.mxu0 0.0
    %210 = vmatprep.subr.mxu0 0.0
    %211 = vmatpush1.msra.mxu0 0.0
    %212 = vmatprep.subr.mxu0 0.0
    %213 = vmatpush1.msra.mxu0 0.0
    %214 = vmatprep.subr.mxu0 0.0
    %215 = vmatpush1.msra.mxu0 0.0
    %216 = vmatprep.subr.mxu0 0.0
    %217 = vmatpush1.msra.mxu0 0.0
    %218 = vmatprep.subr.mxu0 0.0
    %219 = vmatpush1.msra.mxu0 0.0
    %220 = vmatprep.subr.mxu0 0.0
    %221 = vmatpush1.msra.mxu0 0.0
    %222 = vmatprep.subr.mxu0 0.0
    %223 = vmatpush1.msra.mxu0 0.0
    %224 = vmatprep.subr.mxu0 0.0
    %225 = vmatpush1.msra.mxu0 0.0
    %226 = vmatprep.subr.mxu0 0.0
    %227 = vmatpush1.msra.mxu0 0.0
    %228 = vmatprep.subr.mxu0 0.0
    %229 = vmatpush1.msra.mxu0 0.0
    %230 = vmatprep.subr.mxu0 0.0
    %231 = vmatpush1.msra.mxu0 0.0
    %232 = vmatprep.subr.mxu0 0.0
    %233 = vmatpush1.msra.mxu0 0.0
    %234 = vmatprep.mubr.f32.mxu0 0.0
    %235 = vmatmul.mubr.f32.gmra.mrb[0].mxu0 %v162
    %v236 = vpop.f32.mrb[0].mxu0
    %v237 = vadd.f32 %v168, %v236
    %v238 = vpop.f32.mrb[0].mxu0
    %239 = vmatprep.mubr.f32.mxu0 0.0
    %240 = vmatmul.mubr.f32.gmra.mrb[0].mxu0 %v163
    %v241 = vpop.f32.mrb[0].mxu0
    %v242 = vadd.f32 %v168, %v241
    %v243 = vpop.f32.mrb[0].mxu0
    %244 = vdwg.mxu0
    %s245 = sadd.f32 %s70, 0.0625
    %v246 = vmul.f32 %v237, 0.0625
    %v247 = vmul.f32 %v242, 0.0625
    %v248 = vadd.f32 %v66, %v246
    %v249 = vadd.f32 %v67, %v247
    %v250 = vstv %s245
    %v251 = vmul.f32 %v250, %v39
    %v253 = vlaneseq
    %v254 = vshrl.u32 %v253, 7
    %v255 = vsub.s32 0, %v254
    %v256 = vrot.slane %v251, %v255
    %258 = vmatprep.subr.mxu0 0.0
    %259 = vmatpush1.msra.mxu0 %v23
    %260 = vmatprep.subr.mxu0 0.0
    %261 = vmatpush1.msra.mxu0 %v24
    %262 = vmatprep.subr.mxu0 0.0
    %263 = vmatpush1.msra.mxu0 %v25
    %264 = vmatprep.subr.mxu0 0.0
    %265 = vmatpush1.msra.mxu0 %v26
    %266 = vmatprep.subr.mxu0 0.0
    %267 = vmatpush1.msra.mxu0 %v27
    %268 = vmatprep.subr.mxu0 0.0
    %269 = vmatpush1.msra.mxu0 %v28
    %270 = vmatprep.subr.mxu0 0.0
    %271 = vmatpush1.msra.mxu0 %v29
    %272 = vmatprep.subr.mxu0 0.0
    %273 = vmatpush1.msra.mxu0 %v30
    %274 = vmatprep.subr.mxu0 0.0
    %275 = vmatpush1.msra.mxu0 %v31
    %276 = vmatprep.subr.mxu0 0.0
    %277 = vmatpush1.msra.mxu0 %v32
    %278 = vmatprep.subr.mxu0 0.0
    %279 = vmatpush1.msra.mxu0 %v33
    %280 = vmatprep.subr.mxu0 0.0
    %281 = vmatpush1.msra.mxu0 %v34
    %282 = vmatprep.subr.mxu0 0.0
    %283 = vmatpush1.msra.mxu0 %v35
    %284 = vmatprep.subr.mxu0 0.0
    %285 = vmatpush1.msra.mxu0 %v36
    %286 = vmatprep.subr.mxu0 0.0
    %287 = vmatpush1.msra.mxu0 %v37
    %288 = vmatprep.subr.mxu0 0.0
    %289 = vmatpush1.msra.mxu0 %v38
    %290 = vmatprep.subr.mxu0 0.0
    %291 = vmatpush1.msra.mxu0 0.0
    %292 = vmatprep.subr.mxu0 0.0
    %293 = vmatpush1.msra.mxu0 0.0
    %294 = vmatprep.subr.mxu0 0.0
    %295 = vmatpush1.msra.mxu0 0.0
    %296 = vmatprep.subr.mxu0 0.0
    %297 = vmatpush1.msra.mxu0 0.0
    %298 = vmatprep.subr.mxu0 0.0
    %299 = vmatpush1.msra.mxu0 0.0
    %300 = vmatprep.subr.mxu0 0.0
    %301 = vmatpush1.msra.mxu0 0.0
    %302 = vmatprep.subr.mxu0 0.0
    %303 = vmatpush1.msra.mxu0 0.0
    %304 = vmatprep.subr.mxu0 0.0
    %305 = vmatpush1.msra.mxu0 0.0
    %306 = vmatprep.subr.mxu0 0.0
    %307 = vmatpush1.msra.mxu0 0.0
    %308 = vmatprep.subr.mxu0 0.0
    %309 = vmatpush1.msra.mxu0 0.0
    %310 = vmatprep.subr.mxu0 0.0
    %311 = vmatpush1.msra.mxu0 0.0
    %312 = vmatprep.subr.mxu0 0.0
    %313 = vmatpush1.msra.mxu0 0.0
    %314 = vmatprep.subr.mxu0 0.0
    %315 = vmatpush1.msra.mxu0 0.0
    %316 = vmatprep.subr.mxu0 0.0
    %317 = vmatpush1.msra.mxu0 0.0
    %318 = vmatprep.subr.mxu0 0.0
    %319 = vmatpush1.msra.mxu0 0.0
    %320 = vmatprep.subr.mxu0 0.0
    %321 = vmatpush1.msra.mxu0 0.0
    %322 = vmatprep.mubr.f32.mxu0 0.0
    %323 = vmatmul.mubr.f32.gmra.mrb[0].mxu0 %v248
    %v324 = vpop.f32.mrb[0].mxu0
    %v325 = vadd.f32 %v256, %v324
    %v326 = vpop.f32.mrb[0].mxu0
    %327 = vmatprep.mubr.f32.mxu0 0.0
    %328 = vmatmul.mubr.f32.gmra.mrb[0].mxu0 %v249
    %v329 = vpop.f32.mrb[0].mxu0
    %v330 = vadd.f32 %v256, %v329
    %v331 = vpop.f32.mrb[0].mxu0
    %332 = vdwg.mxu0
    %v333 = vadd.f32 %v325, %v158
    %v334 = vadd.f32 %v330, %v158
    %v335 = vtanh.pop %v333
    %v336 = vtanh.pop %v334
    %337 = vmatprep.subr.mxu0 0.0
    %338 = vmatpush1.msra.mxu0 %v41
    %339 = vmatprep.subr.mxu0 0.0
    %340 = vmatpush1.msra.mxu0 %v42
    %341 = vmatprep.subr.mxu0 0.0
    %342 = vmatpush1.msra.mxu0 %v43
    %343 = vmatprep.subr.mxu0 0.0
    %344 = vmatpush1.msra.mxu0 %v44
    %345 = vmatprep.subr.mxu0 0.0
    %346 = vmatpush1.msra.mxu0 %v45
    %347 = vmatprep.subr.mxu0 0.0
    %348 = vmatpush1.msra.mxu0 %v46
    %349 = vmatprep.subr.mxu0 0.0
    %350 = vmatpush1.msra.mxu0 %v47
    %351 = vmatprep.subr.mxu0 0.0
    %352 = vmatpush1.msra.mxu0 %v48
    %353 = vmatprep.subr.mxu0 0.0
    %354 = vmatpush1.msra.mxu0 %v49
    %355 = vmatprep.subr.mxu0 0.0
    %356 = vmatpush1.msra.mxu0 %v50
    %357 = vmatprep.subr.mxu0 0.0
    %358 = vmatpush1.msra.mxu0 %v51
    %359 = vmatprep.subr.mxu0 0.0
    %360 = vmatpush1.msra.mxu0 %v52
    %361 = vmatprep.subr.mxu0 0.0
    %362 = vmatpush1.msra.mxu0 %v53
    %363 = vmatprep.subr.mxu0 0.0
    %364 = vmatpush1.msra.mxu0 %v54
    %365 = vmatprep.subr.mxu0 0.0
    %366 = vmatpush1.msra.mxu0 %v55
    %367 = vmatprep.subr.mxu0 0.0
    %368 = vmatpush1.msra.mxu0 %v56
    %369 = vmatprep.subr.mxu0 0.0
    %370 = vmatpush1.msra.mxu0 0.0
    %371 = vmatprep.subr.mxu0 0.0
    %372 = vmatpush1.msra.mxu0 0.0
    %373 = vmatprep.subr.mxu0 0.0
    %374 = vmatpush1.msra.mxu0 0.0
    %375 = vmatprep.subr.mxu0 0.0
    %376 = vmatpush1.msra.mxu0 0.0
    %377 = vmatprep.subr.mxu0 0.0
    %378 = vmatpush1.msra.mxu0 0.0
    %379 = vmatprep.subr.mxu0 0.0
    %380 = vmatpush1.msra.mxu0 0.0
    %381 = vmatprep.subr.mxu0 0.0
    %382 = vmatpush1.msra.mxu0 0.0
    %383 = vmatprep.subr.mxu0 0.0
    %384 = vmatpush1.msra.mxu0 0.0
    %385 = vmatprep.subr.mxu0 0.0
    %386 = vmatpush1.msra.mxu0 0.0
    %387 = vmatprep.subr.mxu0 0.0
    %388 = vmatpush1.msra.mxu0 0.0
    %389 = vmatprep.subr.mxu0 0.0
    %390 = vmatpush1.msra.mxu0 0.0
    %391 = vmatprep.subr.mxu0 0.0
    %392 = vmatpush1.msra.mxu0 0.0
    %393 = vmatprep.subr.mxu0 0.0
    %394 = vmatpush1.msra.mxu0 0.0
    %395 = vmatprep.subr.mxu0 0.0
    %396 = vmatpush1.msra.mxu0 0.0
    %397 = vmatprep.subr.mxu0 0.0
    %398 = vmatpush1.msra.mxu0 0.0
    %399 = vmatprep.subr.mxu0 0.0
    %400 = vmatpush1.msra.mxu0 0.0
    %401 = vmatprep.mubr.f32.mxu0 0.0
    %402 = vmatmul.mubr.f32.gmra.mrb[0].mxu0 %v335
    %v403 = vpop.f32.mrb[0].mxu0
    %v404 = vadd.f32 %v168, %v403
    %v405 = vpop.f32.mrb[0].mxu0
    %406 = vmatprep.mubr.f32.mxu0 0.0
    %407 = vmatmul.mubr.f32.gmra.mrb[0].mxu0 %v336
    %v408 = vpop.f32.mrb[0].mxu0
    %v409 = vadd.f32 %v168, %v408
    %v410 = vpop.f32.mrb[0].mxu0
    %411 = vdwg.mxu0
    %v412 = vmul.f32 %v404, 0.0625
    %v413 = vmul.f32 %v409, 0.0625
    %v414 = vadd.f32 %v66, %v412
    %v415 = vadd.f32 %v67, %v413
    %416 = vmatprep.subr.mxu0 0.0
    %417 = vmatpush1.msra.mxu0 %v23
    %418 = vmatprep.subr.mxu0 0.0
    %419 = vmatpush1.msra.mxu0 %v24
    %420 = vmatprep.subr.mxu0 0.0
    %421 = vmatpush1.msra.mxu0 %v25
    %422 = vmatprep.subr.mxu0 0.0
    %423 = vmatpush1.msra.mxu0 %v26
    %424 = vmatprep.subr.mxu0 0.0
    %425 = vmatpush1.msra.mxu0 %v27
    %426 = vmatprep.subr.mxu0 0.0
    %427 = vmatpush1.msra.mxu0 %v28
    %428 = vmatprep.subr.mxu0 0.0
    %429 = vmatpush1.msra.mxu0 %v29
    %430 = vmatprep.subr.mxu0 0.0
    %431 = vmatpush1.msra.mxu0 %v30
    %432 = vmatprep.subr.mxu0 0.0
    %433 = vmatpush1.msra.mxu0 %v31
    %434 = vmatprep.subr.mxu0 0.0
    %435 = vmatpush1.msra.mxu0 %v32
    %436 = vmatprep.subr.mxu0 0.0
    %437 = vmatpush1.msra.mxu0 %v33
    %438 = vmatprep.subr.mxu0 0.0
    %439 = vmatpush1.msra.mxu0 %v34
    %440 = vmatprep.subr.mxu0 0.0
    %441 = vmatpush1.msra.mxu0 %v35
    %442 = vmatprep.subr.mxu0 0.0
    %443 = vmatpush1.msra.mxu0 %v36
    %444 = vmatprep.subr.mxu0 0.0
    %445 = vmatpush1.msra.mxu0 %v37
    %446 = vmatprep.subr.mxu0 0.0
    %447 = vmatpush1.msra.mxu0 %v38
    %448 = vmatprep.subr.mxu0 0.0
    %449 = vmatpush1.msra.mxu0 0.0
    %450 = vmatprep.subr.mxu0 0.0
    %451 = vmatpush1.msra.mxu0 0.0
    %452 = vmatprep.subr.mxu0 0.0
    %453 = vmatpush1.msra.mxu0 0.0
    %454 = vmatprep.subr.mxu0 0.0
    %455 = vmatpush1.msra.mxu0 0.0
    %456 = vmatprep.subr.mxu0 0.0
    %457 = vmatpush1.msra.mxu0 0.0
    %458 = vmatprep.subr.mxu0 0.0
    %459 = vmatpush1.msra.mxu0 0.0
    %460 = vmatprep.subr.mxu0 0.0
    %461 = vmatpush1.msra.mxu0 0.0
    %462 = vmatprep.subr.mxu0 0.0
    %463 = vmatpush1.msra.mxu0 0.0
    %464 = vmatprep.subr.mxu0 0.0
    %465 = vmatpush1.msra.mxu0 0.0
    %466 = vmatprep.subr.mxu0 0.0
    %467 = vmatpush1.msra.mxu0 0.0
    %468 = vmatprep.subr.mxu0 0.0
    %469 = vmatpush1.msra.mxu0 0.0
    %470 = vmatprep.subr.mxu0 0.0
    %471 = vmatpush1.msra.mxu0 0.0
    %472 = vmatprep.subr.mxu0 0.0
    %473 = vmatpush1.msra.mxu0 0.0
    %474 = vmatprep.subr.mxu0 0.0
    %475 = vmatpush1.msra.mxu0 0.0
    %476 = vmatprep.subr.mxu0 0.0
    %477 = vmatpush1.msra.mxu0 0.0
    %478 = vmatprep.subr.mxu0 0.0
    %479 = vmatpush1.msra.mxu0 0.0
    %480 = vmatprep.mubr.f32.mxu0 0.0
    %481 = vmatmul.mubr.f32.gmra.mrb[0].mxu0 %v414
    %v482 = vpop.f32.mrb[0].mxu0
    %v483 = vadd.f32 %v256, %v482
    %v484 = vpop.f32.mrb[0].mxu0
    %485 = vmatprep.mubr.f32.mxu0 0.0
    %486 = vmatmul.mubr.f32.gmra.mrb[0].mxu0 %v415
    %v487 = vpop.f32.mrb[0].mxu0
    %v488 = vadd.f32 %v256, %v487
    %v489 = vpop.f32.mrb[0].mxu0
    %490 = vdwg.mxu0
    %v491 = vadd.f32 %v483, %v158
    %v492 = vadd.f32 %v488, %v158
    %v493 = vtanh.pop %v491
    %v494 = vtanh.pop %v492
    %495 = vmatprep.subr.mxu0 0.0
    %496 = vmatpush1.msra.mxu0 %v41
    %497 = vmatprep.subr.mxu0 0.0
    %498 = vmatpush1.msra.mxu0 %v42
    %499 = vmatprep.subr.mxu0 0.0
    %500 = vmatpush1.msra.mxu0 %v43
    %501 = vmatprep.subr.mxu0 0.0
    %502 = vmatpush1.msra.mxu0 %v44
    %503 = vmatprep.subr.mxu0 0.0
    %504 = vmatpush1.msra.mxu0 %v45
    %505 = vmatprep.subr.mxu0 0.0
    %506 = vmatpush1.msra.mxu0 %v46
    %507 = vmatprep.subr.mxu0 0.0
    %508 = vmatpush1.msra.mxu0 %v47
    %509 = vmatprep.subr.mxu0 0.0
    %510 = vmatpush1.msra.mxu0 %v48
    %511 = vmatprep.subr.mxu0 0.0
    %512 = vmatpush1.msra.mxu0 %v49
    %513 = vmatprep.subr.mxu0 0.0
    %514 = vmatpush1.msra.mxu0 %v50
    %515 = vmatprep.subr.mxu0 0.0
    %516 = vmatpush1.msra.mxu0 %v51
    %517 = vmatprep.subr.mxu0 0.0
    %518 = vmatpush1.msra.mxu0 %v52
    %519 = vmatprep.subr.mxu0 0.0
    %520 = vmatpush1.msra.mxu0 %v53
    %521 = vmatprep.subr.mxu0 0.0
    %522 = vmatpush1.msra.mxu0 %v54
    %523 = vmatprep.subr.mxu0 0.0
    %524 = vmatpush1.msra.mxu0 %v55
    %525 = vmatprep.subr.mxu0 0.0
    %526 = vmatpush1.msra.mxu0 %v56
    %527 = vmatprep.subr.mxu0 0.0
    %528 = vmatpush1.msra.mxu0 0.0
    %529 = vmatprep.subr.mxu0 0.0
    %530 = vmatpush1.msra.mxu0 0.0
    %531 = vmatprep.subr.mxu0 0.0
    %532 = vmatpush1.msra.mxu0 0.0
    %533 = vmatprep.subr.mxu0 0.0
    %534 = vmatpush1.msra.mxu0 0.0
    %535 = vmatprep.subr.mxu0 0.0
    %536 = vmatpush1.msra.mxu0 0.0
    %537 = vmatprep.subr.mxu0 0.0
    %538 = vmatpush1.msra.mxu0 0.0
    %539 = vmatprep.subr.mxu0 0.0
    %540 = vmatpush1.msra.mxu0 0.0
    %541 = vmatprep.subr.mxu0 0.0
    %542 = vmatpush1.msra.mxu0 0.0
    %543 = vmatprep.subr.mxu0 0.0
    %544 = vmatpush1.msra.mxu0 0.0
    %545 = vmatprep.subr.mxu0 0.0
    %546 = vmatpush1.msra.mxu0 0.0
    %547 = vmatprep.subr.mxu0 0.0
    %548 = vmatpush1.msra.mxu0 0.0
    %549 = vmatprep.subr.mxu0 0.0
    %550 = vmatpush1.msra.mxu0 0.0
    %551 = vmatprep.subr.mxu0 0.0
    %552 = vmatpush1.msra.mxu0 0.0
    %553 = vmatprep.subr.mxu0 0.0
    %554 = vmatpush1.msra.mxu0 0.0
    %555 = vmatprep.subr.mxu0 0.0
    %556 = vmatpush1.msra.mxu0 0.0
    %557 = vmatprep.subr.mxu0 0.0
    %558 = vmatpush1.msra.mxu0 0.0
    %559 = vmatprep.mubr.f32.mxu0 0.0
    %560 = vmatmul.mubr.f32.gmra.mrb[0].mxu0 %v493
    %v561 = vpop.f32.mrb[0].mxu0
    %v562 = vadd.f32 %v168, %v561
    %v563 = vpop.f32.mrb[0].mxu0
    %564 = vmatprep.mubr.f32.mxu0 0.0
    %565 = vmatmul.mubr.f32.gmra.mrb[0].mxu0 %v494
    %v566 = vpop.f32.mrb[0].mxu0
    %v567 = vadd.f32 %v168, %v566
    %v568 = vpop.f32.mrb[0].mxu0
    %569 = vdwg.mxu0
    %s570 = sadd.f32 %s70, 0.125
    %v571 = vmul.f32 %v562, 0.125
    %v572 = vmul.f32 %v567, 0.125
    %v573 = vadd.f32 %v66, %v571
    %v574 = vadd.f32 %v67, %v572
    %v575 = vstv %s570
    %v576 = vmul.f32 %v575, %v39
    %v578 = vlaneseq
    %v579 = vshrl.u32 %v578, 7
    %v580 = vsub.s32 0, %v579
    %v581 = vrot.slane %v576, %v580
    %583 = vmatprep.subr.mxu0 0.0
    %584 = vmatpush1.msra.mxu0 %v23
    %585 = vmatprep.subr.mxu0 0.0
    %586 = vmatpush1.msra.mxu0 %v24
    %587 = vmatprep.subr.mxu0 0.0
    %588 = vmatpush1.msra.mxu0 %v25
    %589 = vmatprep.subr.mxu0 0.0
    %590 = vmatpush1.msra.mxu0 %v26
    %591 = vmatprep.subr.mxu0 0.0
    %592 = vmatpush1.msra.mxu0 %v27
    %593 = vmatprep.subr.mxu0 0.0
    %594 = vmatpush1.msra.mxu0 %v28
    %595 = vmatprep.subr.mxu0 0.0
    %596 = vmatpush1.msra.mxu0 %v29
    %597 = vmatprep.subr.mxu0 0.0
    %598 = vmatpush1.msra.mxu0 %v30
    %599 = vmatprep.subr.mxu0 0.0
    %600 = vmatpush1.msra.mxu0 %v31
    %601 = vmatprep.subr.mxu0 0.0
    %602 = vmatpush1.msra.mxu0 %v32
    %603 = vmatprep.subr.mxu0 0.0
    %604 = vmatpush1.msra.mxu0 %v33
    %605 = vmatprep.subr.mxu0 0.0
    %606 = vmatpush1.msra.mxu0 %v34
    %607 = vmatprep.subr.mxu0 0.0
    %608 = vmatpush1.msra.mxu0 %v35
    %609 = vmatprep.subr.mxu0 0.0
    %610 = vmatpush1.msra.mxu0 %v36
    %611 = vmatprep.subr.mxu0 0.0
    %612 = vmatpush1.msra.mxu0 %v37
    %613 = vmatprep.subr.mxu0 0.0
    %614 = vmatpush1.msra.mxu0 %v38
    %615 = vmatprep.subr.mxu0 0.0
    %616 = vmatpush1.msra.mxu0 0.0
    %617 = vmatprep.subr.mxu0 0.0
    %618 = vmatpush1.msra.mxu0 0.0
    %619 = vmatprep.subr.mxu0 0.0
    %620 = vmatpush1.msra.mxu0 0.0
    %621 = vmatprep.subr.mxu0 0.0
    %622 = vmatpush1.msra.mxu0 0.0
    %623 = vmatprep.subr.mxu0 0.0
    %624 = vmatpush1.msra.mxu0 0.0
    %625 = vmatprep.subr.mxu0 0.0
    %626 = vmatpush1.msra.mxu0 0.0
    %627 = vmatprep.subr.mxu0 0.0
    %628 = vmatpush1.msra.mxu0 0.0
    %629 = vmatprep.subr.mxu0 0.0
    %630 = vmatpush1.msra.mxu0 0.0
    %631 = vmatprep.subr.mxu0 0.0
    %632 = vmatpush1.msra.mxu0 0.0
    %633 = vmatprep.subr.mxu0 0.0
    %634 = vmatpush1.msra.mxu0 0.0
    %635 = vmatprep.subr.mxu0 0.0
    %636 = vmatpush1.msra.mxu0 0.0
    %637 = vmatprep.subr.mxu0 0.0
    %638 = vmatpush1.msra.mxu0 0.0
    %639 = vmatprep.subr.mxu0 0.0
    %640 = vmatpush1.msra.mxu0 0.0
    %641 = vmatprep.subr.mxu0 0.0
    %642 = vmatpush1.msra.mxu0 0.0
    %643 = vmatprep.subr.mxu0 0.0
    %644 = vmatpush1.msra.mxu0 0.0
    %645 = vmatprep.subr.mxu0 0.0
    %646 = vmatpush1.msra.mxu0 0.0
    %647 = vmatprep.mubr.f32.mxu0 0.0
    %648 = vmatmul.mubr.f32.gmra.mrb[0].mxu0 %v573
    %v649 = vpop.f32.mrb[0].mxu0
    %v650 = vadd.f32 %v581, %v649
    %v651 = vpop.f32.mrb[0].mxu0
    %652 = vmatprep.mubr.f32.mxu0 0.0
    %653 = vmatmul.mubr.f32.gmra.mrb[0].mxu0 %v574
    %v654 = vpop.f32.mrb[0].mxu0
    %v655 = vadd.f32 %v581, %v654
    %v656 = vpop.f32.mrb[0].mxu0
    %657 = vdwg.mxu0
    %v658 = vadd.f32 %v650, %v158
    %v659 = vadd.f32 %v655, %v158
    %v660 = vtanh.pop %v658
    %v661 = vtanh.pop %v659
    %662 = vmatprep.subr.mxu0 0.0
    %663 = vmatpush1.msra.mxu0 %v41
    %664 = vmatprep.subr.mxu0 0.0
    %665 = vmatpush1.msra.mxu0 %v42
    %666 = vmatprep.subr.mxu0 0.0
    %667 = vmatpush1.msra.mxu0 %v43
    %668 = vmatprep.subr.mxu0 0.0
    %669 = vmatpush1.msra.mxu0 %v44
    %670 = vmatprep.subr.mxu0 0.0
    %671 = vmatpush1.msra.mxu0 %v45
    %672 = vmatprep.subr.mxu0 0.0
    %673 = vmatpush1.msra.mxu0 %v46
    %674 = vmatprep.subr.mxu0 0.0
    %675 = vmatpush1.msra.mxu0 %v47
    %676 = vmatprep.subr.mxu0 0.0
    %677 = vmatpush1.msra.mxu0 %v48
    %678 = vmatprep.subr.mxu0 0.0
    %679 = vmatpush1.msra.mxu0 %v49
    %680 = vmatprep.subr.mxu0 0.0
    %681 = vmatpush1.msra.mxu0 %v50
    %682 = vmatprep.subr.mxu0 0.0
    %683 = vmatpush1.msra.mxu0 %v51
    %684 = vmatprep.subr.mxu0 0.0
    %685 = vmatpush1.msra.mxu0 %v52
    %686 = vmatprep.subr.mxu0 0.0
    %687 = vmatpush1.msra.mxu0 %v53
    %688 = vmatprep.subr.mxu0 0.0
    %689 = vmatpush1.msra.mxu0 %v54
    %690 = vmatprep.subr.mxu0 0.0
    %691 = vmatpush1.msra.mxu0 %v55
    %692 = vmatprep.subr.mxu0 0.0
    %693 = vmatpush1.msra.mxu0 %v56
    %694 = vmatprep.subr.mxu0 0.0
    %695 = vmatpush1.msra.mxu0 0.0
    %696 = vmatprep.subr.mxu0 0.0
    %697 = vmatpush1.msra.mxu0 0.0
    %698 = vmatprep.subr.mxu0 0.0
    %699 = vmatpush1.msra.mxu0 0.0
    %700 = vmatprep.subr.mxu0 0.0
    %701 = vmatpush1.msra.mxu0 0.0
    %702 = vmatprep.subr.mxu0 0.0
    %703 = vmatpush1.msra.mxu0 0.0
    %704 = vmatprep.subr.mxu0 0.0
    %705 = vmatpush1.msra.mxu0 0.0
    %706 = vmatprep.subr.mxu0 0.0
    %707 = vmatpush1.msra.mxu0 0.0
    %708 = vmatprep.subr.mxu0 0.0
    %709 = vmatpush1.msra.mxu0 0.0
    %710 = vmatprep.subr.mxu0 0.0
    %711 = vmatpush1.msra.mxu0 0.0
    %712 = vmatprep.subr.mxu0 0.0
    %713 = vmatpush1.msra.mxu0 0.0
    %714 = vmatprep.subr.mxu0 0.0
    %715 = vmatpush1.msra.mxu0 0.0
    %716 = vmatprep.subr.mxu0 0.0
    %717 = vmatpush1.msra.mxu0 0.0
    %718 = vmatprep.subr.mxu0 0.0
    %719 = vmatpush1.msra.mxu0 0.0
    %720 = vmatprep.subr.mxu0 0.0
    %721 = vmatpush1.msra.mxu0 0.0
    %722 = vmatprep.subr.mxu0 0.0
    %723 = vmatpush1.msra.mxu0 0.0
    %724 = vmatprep.subr.mxu0 0.0
    %725 = vmatpush1.msra.mxu0 0.0
    %726 = vmatprep.mubr.f32.mxu0 0.0
    %727 = vmatmul.mubr.f32.gmra.mrb[0].mxu0 %v660
    %v728 = vpop.f32.mrb[0].mxu0
    %v729 = vadd.f32 %v168, %v728
    %v730 = vpop.f32.mrb[0].mxu0
    %731 = vmatprep.mubr.f32.mxu0 0.0
    %732 = vmatmul.mubr.f32.gmra.mrb[0].mxu0 %v661
    %v733 = vpop.f32.mrb[0].mxu0
    %v734 = vadd.f32 %v168, %v733
    %v735 = vpop.f32.mrb[0].mxu0
    %736 = vdwg.mxu0
    %v737 = vmul.f32 %v404, 2.0
    %v738 = vmul.f32 %v409, 2.0
    %v739 = vadd.f32 %v237, %v737
    %v740 = vadd.f32 %v242, %v738
    %v741 = vmul.f32 %v562, 2.0
    %v742 = vmul.f32 %v567, 2.0
    %v743 = vadd.f32 %v739, %v741
    %v744 = vadd.f32 %v740, %v742
    %v745 = vadd.f32 %v743, %v729
    %v746 = vadd.f32 %v744, %v734
    %v747 = vmul.f32 %v745, 0.020833334
    %v748 = vmul.f32 %v746, 0.020833334
    %v749 = vadd.f32 %v66, %v747
    %v750 = vadd.f32 %v67, %v748
  $region30: #{ode_block_forward.1} parent=0 // loop_footer
    %s65 = sadd.s32 1, %s61
  $region31: #{ode_block_forward.1} parent=0 // loop_footer_branch
    %60 = sbr.rel target = $region27
  $region32: #{ode_block_forward.1} parent=0 // loop_exit
    _
  %751 = vst [vmem:[%s6] sm:$0xff] %v66
  %752 = vst [vmem:[%s6 + $0x8] sm:$0xff] %v67
  // Predicated region
  $region33: #{ode_block_forward.1} parent=0 // pred_check
    _
  $region34: #{ode_block_forward.1} parent=0 // pred_check_branch
    %754 = sbr.rel (0) target = $region36
  $region35: #{ode_block_forward.1} parent=0 // pred_region
    _
  $region36: #{ode_block_forward.1} parent=0 // pred_fallthru
    _
  // Predicated region
  $region37: #{ode_block_forward.1} parent=0 // pred_check
    _
  $region38: #{ode_block_forward.1} parent=0 // pred_check_branch
    %756 = sbr.rel (0) target = $region40
  $region39: #{ode_block_forward.1} parent=0 // pred_region
    _
  $region40: #{ode_block_forward.1} parent=0 // pred_fallthru
    _

</llo_original>
